<compile_context>
chip_gen: v7x
topology: tpu7x:2x2x1
jax: 0.10.0
libtpu: 0.0.40
codegen_flags: <defaults>
</compile_context>

<pallas_src>
import jax
import jax.numpy as jnp
from jax import lax
from jax.experimental import pallas as pl
from jax.experimental.pallas import tpu as pltpu


def _round_up(x, m):
    return ((x + m - 1) // m) * m


def _noisy_linear_kernel(x_ref, mu_w_ref, sg_w_ref, bias_ref, f_in_ref,
                         f_out_ref, o_ref, acc_ref):
    """One (Out-tile, K-tile) step of
       y = x @ mu_W^T + f_out * ((x * f_in) @ sigma_W^T) + bias_fused
    with an f32 VMEM accumulator carried across the K (In) axis."""
    k = pl.program_id(1)

    @pl.when(k == 0)
    def _init():
        acc_ref[...] = jnp.zeros_like(acc_ref)

    w_dtype = mu_w_ref.dtype
    x32 = x_ref[...].astype(jnp.float32)            # (Bp, TK), tiny vs weights
    xf32 = x32 * f_in_ref[...]                      # scale by f(eps_in)
    x_mm = x32.astype(w_dtype)
    xf_mm = xf32.astype(w_dtype)

    # Weight tiles go DMA -> MXU untouched (native (Out, In) layout,
    # rhs-transposed contraction); accumulation stays f32.
    y_mu = lax.dot_general(
        x_mm, mu_w_ref[...],
        dimension_numbers=(((1,), (1,)), ((), ())),
        preferred_element_type=jnp.float32)         # (Bp, TN)
    y_sg = lax.dot_general(
        xf_mm, sg_w_ref[...],
        dimension_numbers=(((1,), (1,)), ((), ())),
        preferred_element_type=jnp.float32)         # (Bp, TN)

    acc_ref[...] += y_mu + f_out_ref[...] * y_sg

    @pl.when(k == pl.num_programs(1) - 1)
    def _finalize():
        o_ref[...] = (acc_ref[...] + bias_ref[...]).astype(o_ref.dtype)


def _pick_tiles(B_p, In_p, Out_p, w_itemsize, x_itemsize,
                weight_budget_bytes=12 << 20, max_tk=4096):
    """Lane-dense (TN, TK): largest tiles whose double-buffered weight + x
    buffers stay inside a budget sized for v7x's 64 MiB VMEM."""
    tn_cands = [c for c in (512, 256, 128) if Out_p % c == 0]
    # Prefer >= 4 Out tiles so both v7x TensorCores get >= 2 pipelined steps.
    pref = [c for c in tn_cands if Out_p // c >= 4]
    tn_cands = pref + [c for c in tn_cands if c not in pref]
    for tn in tn_cands:
        for tk in range(min(In_p, max_tk), 0, -128):
            if In_p % tk:
                continue
            w_bytes = 2 * 2 * tn * tk * w_itemsize   # mu + sigma, 2 bufs each
            x_bytes = 2 * B_p * tk * x_itemsize      # x, 2 bufs
            if w_bytes + x_bytes <= weight_budget_bytes:
                return tn, tk
    return 128, 128


def noisy_linear(x, mu_weight, sigma_weight, mu_bias, sigma_bias,
                 eps_in, eps_out):
    """x: (B, In).  mu/sigma_weight: (Out, In) (f32 or bf16 -- the weight
    stream is fed to the MXU untouched, so store them in bf16 for the ~2x
    HBM-bandwidth win on v6e/v7x if precision allows).  mu/sigma_bias,
    eps_out: (Out,).  eps_in: (In,).  eps_* are raw N(0,1) draws."""
    B, In = x.shape
    Out = mu_weight.shape[0]
    out_dtype = x.dtype

    # f(eps) and the fused bias are computed once here (tiny), not per tile.
    f = lambda e: jnp.sign(e) * jnp.sqrt(jnp.abs(e))
    f_in = f(eps_in.astype(jnp.float32))                       # (In,)
    f_out = f(eps_out.astype(jnp.float32))                     # (Out,)
    bias_fused = (mu_bias.astype(jnp.float32)
                  + sigma_bias.astype(jnp.float32) * f_out)    # (Out,)

    # --- pad to lane/sublane-dense sizes (zero padding is exact).
    sub = 8 * max(1, 4 // jnp.dtype(x.dtype).itemsize)         # 8 f32 / 16 bf16
    B_p = _round_up(B, sub)
    In_p = _round_up(In, 128)
    Out_p = _round_up(Out, 128)
    if B_p != B or In_p != In:
        x = jnp.pad(x, ((0, B_p - B), (0, In_p - In)))
    if In_p != In or Out_p != Out:
        mu_weight = jnp.pad(mu_weight, ((0, Out_p - Out), (0, In_p - In)))
        sigma_weight = jnp.pad(sigma_weight,
                               ((0, Out_p - Out), (0, In_p - In)))
    if In_p != In:
        f_in = jnp.pad(f_in, (0, In_p - In))
    if Out_p != Out:
        f_out = jnp.pad(f_out, (0, Out_p - Out))
        bias_fused = jnp.pad(bias_fused, (0, Out_p - Out))

    f_in = f_in.reshape(1, In_p)
    f_out = f_out.reshape(1, Out_p)
    bias_fused = bias_fused.reshape(1, Out_p)

    w_itemsize = jnp.dtype(mu_weight.dtype).itemsize
    x_itemsize = jnp.dtype(x.dtype).itemsize
    tn, tk = _pick_tiles(B_p, In_p, Out_p, w_itemsize, x_itemsize)
    grid_n = Out_p // tn
    grid_k = In_p // tk

    # Explicit scoped-VMEM budget counting ALL buffers (weights, x, out, acc,
    # small eps/bias tiles) plus headroom; v5e's default scoped limit is only
    # 16 MiB and v7x physical VMEM is 64 MiB, so size it explicitly.
    vmem_bytes = (2 * 2 * tn * tk * w_itemsize                 # mu+sigma bufs
                  + 2 * B_p * tk * x_itemsize                  # x bufs
                  + 2 * B_p * tn * jnp.dtype(out_dtype).itemsize  # out bufs
                  + B_p * tn * 4                               # f32 acc
                  + 2 * (2 * tn + tk) * 4                      # bias/f_out/f_in
                  + (4 << 20))                                 # headroom
    vmem_bytes = int(min(max(vmem_bytes, 16 << 20), 48 << 20))

    out = pl.pallas_call(
        _noisy_linear_kernel,
        out_shape=jax.ShapeDtypeStruct((B_p, Out_p), out_dtype),
        grid_spec=pltpu.PrefetchScalarGridSpec(
            num_scalar_prefetch=0,
            grid=(grid_n, grid_k),                    # reduction axis last
            in_specs=[
                pl.BlockSpec((B_p, tk), lambda j, k: (0, k)),   # x
                pl.BlockSpec((tn, tk), lambda j, k: (j, k)),    # mu_W tile
                pl.BlockSpec((tn, tk), lambda j, k: (j, k)),    # sigma_W tile
                pl.BlockSpec((1, tn), lambda j, k: (0, j)),     # fused bias
                pl.BlockSpec((1, tk), lambda j, k: (0, k)),     # f(eps_in)
                pl.BlockSpec((1, tn), lambda j, k: (0, j)),     # f(eps_out)
            ],
            out_specs=pl.BlockSpec((B_p, tn), lambda j, k: (0, j)),
            scratch_shapes=[pltpu.VMEM((B_p, tn), jnp.float32)],
        ),
        compiler_params=pltpu.CompilerParams(
            dimension_semantics=("parallel", "arbitrary"),
            vmem_limit_bytes=vmem_bytes),
    )(x, mu_weight, sigma_weight, bias_fused, f_in, f_out)

    return out[:B, :Out]


if __name__ == "__main__":
    key = jax.random.PRNGKey(0)
    k_x, k_muw, k_mub, k_ein, k_eout = jax.random.split(key, 5)

    batch = 8
    in_features = 32
    out_features = 16
    sigma_zero = 0.5

    mu_bound = 1.0 / (in_features ** 0.5)
    sigma_constant = sigma_zero / (in_features ** 0.5)

    # Deterministic parameter init mirroring NoisyLinear.__init__
    mu_weight = jax.random.uniform(
        k_muw, (out_features, in_features), jnp.float32,
        minval=-mu_bound, maxval=mu_bound)
    mu_bias = jax.random.uniform(
        k_mub, (out_features,), jnp.float32,
        minval=-mu_bound, maxval=mu_bound)
    sigma_weight = jnp.full((out_features, in_features), sigma_constant,
                            jnp.float32)
    sigma_bias = jnp.full((out_features,), sigma_constant, jnp.float32)

    # Forward-pass noise (drawn fresh each forward in the torch module;
    # drawn once deterministically here and passed in explicitly).
    eps_in = jax.random.normal(k_ein, (in_features,), jnp.float32)
    eps_out = jax.random.normal(k_eout, (out_features,), jnp.float32)

    x = jax.random.normal(k_x, (batch, in_features), jnp.float32)

    y = noisy_linear(x, mu_weight, sigma_weight, mu_bias, sigma_bias,
                     eps_in, eps_out)
    y = jax.block_until_ready(y)

    # Reference check in plain JAX (same math as the torch forward).
    f = lambda e: jnp.sign(e) * jnp.sqrt(jnp.abs(e))
    fi, fo = f(eps_in), f(eps_out)
    w = mu_weight + sigma_weight * jnp.outer(fo, fi)
    b = mu_bias + sigma_bias * fo
    y_ref = x @ w.T + b
    assert y.shape == y_ref.shape, "shape mismatch vs reference"
    assert jnp.allclose(y, y_ref, atol=1e-5, rtol=1e-5), "mismatch vs reference"

    print("KERNEL_OK")
</pallas_src>

<mosaic_0001>
module attributes {stable_mosaic.version = 11 : i64} {
  func.func @_noisy_linear_kernel(%arg0: i32, %arg1: i32, %arg2: memref<8x128xf32, #tpu.memory_space<vmem>>, %arg3: memref<128x128xf32, #tpu.memory_space<vmem>>, %arg4: memref<128x128xf32, #tpu.memory_space<vmem>>, %arg5: memref<1x128xf32, #tpu.memory_space<vmem>>, %arg6: memref<1x128xf32, #tpu.memory_space<vmem>>, %arg7: memref<1x128xf32, #tpu.memory_space<vmem>>, %arg8: memref<8x128xf32, #tpu.memory_space<vmem>>, %arg9: memref<8x128xf32, #tpu.memory_space<vmem>>) attributes {dimension_semantics = [#tpu.dimension_semantics<parallel>, #tpu.dimension_semantics<arbitrary>], iteration_bounds = array<i64: 1, 1>, scalar_prefetch = 0 : i64, scratch_operands = 1 : i64, tpu.core_type = #tpu.core_type<tc>, window_params = [{transform_indices = @transform_0, window_bounds = array<i64: 8, 128>}, {transform_indices = @transform_1, window_bounds = array<i64: 128, 128>}, {transform_indices = @transform_2, window_bounds = array<i64: 128, 128>}, {transform_indices = @transform_3, window_bounds = array<i64: 1, 128>}, {transform_indices = @transform_4, window_bounds = array<i64: 1, 128>}, {transform_indices = @transform_5, window_bounds = array<i64: 1, 128>}, {transform_indices = @transform_6, window_bounds = array<i64: 8, 128>}]} {
    %c0_i32 = arith.constant 0 : i32
    %0 = arith.cmpi eq, %arg1, %c0_i32 : i32
    %1 = arith.extui %0 : i1 to i32
    %c0_i32_0 = arith.constant 0 : i32
    %2 = arith.cmpi ne, %1, %c0_i32_0 : i32
    scf.if %2 {
      %cst_17 = arith.constant 0.000000e+00 : f32
      %21 = vector.broadcast %cst_17 : f32 to vector<8x128xf32>
      %c0_18 = arith.constant 0 : index
      %c0_19 = arith.constant 0 : index
      %22 = vector.load %arg9[%c0_18, %c0_19] : memref<8x128xf32, #tpu.memory_space<vmem>>, vector<8x128xf32>
      tpu.vector_store %arg9[%c0_18, %c0_19], %21 {strides = array<i32>} : memref<8x128xf32, #tpu.memory_space<vmem>>, vector<8x128xf32>,
    } else {
    }
    %c0 = arith.constant 0 : index
    %c0_1 = arith.constant 0 : index
    %3 = vector.load %arg2[%c0, %c0_1] : memref<8x128xf32, #tpu.memory_space<vmem>>, vector<8x128xf32>
    %c0_2 = arith.constant 0 : index
    %c0_3 = arith.constant 0 : index
    %4 = vector.load %arg6[%c0_2, %c0_3] : memref<1x128xf32, #tpu.memory_space<vmem>>, vector<1x128xf32>
    %5 = vector.broadcast %4 : vector<1x128xf32> to vector<8x128xf32>
    %6 = arith.mulf %3, %5 : vector<8x128xf32>
    %c0_4 = arith.constant 0 : index
    %c0_5 = arith.constant 0 : index
    %7 = vector.load %arg3[%c0_4, %c0_5] : memref<128x128xf32, #tpu.memory_space<vmem>>, vector<128x128xf32>
    %cst = arith.constant dense<0.000000e+00> : vector<8x128xf32>
    %8 = tpu.matmul %3, %7, %cst {dimension_numbers = #tpu.dot_dimension_numbers<[1], [1], [0], [0], [0, 0, 1, 0], [], []>} : vector<8x128xf32>, vector<128x128xf32>, vector<8x128xf32> -> vector<8x128xf32>
    %c0_6 = arith.constant 0 : index
    %c0_7 = arith.constant 0 : index
    %9 = vector.load %arg4[%c0_6, %c0_7] : memref<128x128xf32, #tpu.memory_space<vmem>>, vector<128x128xf32>
    %cst_8 = arith.constant dense<0.000000e+00> : vector<8x128xf32>
    %10 = tpu.matmul %6, %9, %cst_8 {dimension_numbers = #tpu.dot_dimension_numbers<[1], [1], [0], [0], [0, 0, 1, 0], [], []>} : vector<8x128xf32>, vector<128x128xf32>, vector<8x128xf32> -> vector<8x128xf32>
    %c0_9 = arith.constant 0 : index
    %c0_10 = arith.constant 0 : index
    %11 = vector.load %arg9[%c0_9, %c0_10] : memref<8x128xf32, #tpu.memory_space<vmem>>, vector<8x128xf32>
    %c0_11 = arith.constant 0 : index
    %c0_12 = arith.constant 0 : index
    %12 = vector.load %arg7[%c0_11, %c0_12] : memref<1x128xf32, #tpu.memory_space<vmem>>, vector<1x128xf32>
    %13 = vector.broadcast %12 : vector<1x128xf32> to vector<8x128xf32>
    %14 = arith.mulf %13, %10 : vector<8x128xf32>
    %15 = arith.addf %8, %14 : vector<8x128xf32>
    %16 = arith.addf %11, %15 : vector<8x128xf32>
    %c0_13 = arith.constant 0 : index
    %c0_14 = arith.constant 0 : index
    %17 = vector.load %arg9[%c0_13, %c0_14] : memref<8x128xf32, #tpu.memory_space<vmem>>, vector<8x128xf32>
    tpu.vector_store %arg9[%c0_13, %c0_14], %16 {strides = array<i32>} : memref<8x128xf32, #tpu.memory_space<vmem>>, vector<8x128xf32>,
    %c0_i32_15 = arith.constant 0 : i32
    %18 = arith.cmpi eq, %arg1, %c0_i32_15 : i32
    %19 = arith.extui %18 : i1 to i32
    %c0_i32_16 = arith.constant 0 : i32
    %20 = arith.cmpi ne, %19, %c0_i32_16 : i32
    scf.if %20 {
      %c0_17 = arith.constant 0 : index
      %c0_18 = arith.constant 0 : index
      %21 = vector.load %arg9[%c0_17, %c0_18] : memref<8x128xf32, #tpu.memory_space<vmem>>, vector<8x128xf32>
      %c0_19 = arith.constant 0 : index
      %c0_20 = arith.constant 0 : index
      %22 = vector.load %arg5[%c0_19, %c0_20] : memref<1x128xf32, #tpu.memory_space<vmem>>, vector<1x128xf32>
      %23 = vector.broadcast %22 : vector<1x128xf32> to vector<8x128xf32>
      %24 = arith.addf %21, %23 : vector<8x128xf32>
      %c0_21 = arith.constant 0 : index
      %c0_22 = arith.constant 0 : index
      %25 = vector.load %arg8[%c0_21, %c0_22] : memref<8x128xf32, #tpu.memory_space<vmem>>, vector<8x128xf32>
      tpu.vector_store %arg8[%c0_21, %c0_22], %24 {strides = array<i32>} : memref<8x128xf32, #tpu.memory_space<vmem>>, vector<8x128xf32>,
    } else {
    }
    return
  }
  func.func @transform_0(%arg0: i32, %arg1: i32) -> (i32, i32) {
    %c0_i32 = arith.constant 0 : i32
    %c0_i32_0 = arith.constant 0 : i32
    return %c0_i32, %arg1 : i32, i32
  }
  func.func @transform_1(%arg0: i32, %arg1: i32) -> (i32, i32) {
    %c0_i32 = arith.constant 0 : i32
    return %arg0, %arg1 : i32, i32
  }
  func.func @transform_2(%arg0: i32, %arg1: i32) -> (i32, i32) {
    %c0_i32 = arith.constant 0 : i32
    return %arg0, %arg1 : i32, i32
  }
  func.func @transform_3(%arg0: i32, %arg1: i32) -> (i32, i32) {
    %c0_i32 = arith.constant 0 : i32
    %c0_i32_0 = arith.constant 0 : i32
    return %c0_i32, %arg0 : i32, i32
  }
  func.func @transform_4(%arg0: i32, %arg1: i32) -> (i32, i32) {
    %c0_i32 = arith.constant 0 : i32
    %c0_i32_0 = arith.constant 0 : i32
    return %c0_i32, %arg1 : i32, i32
  }
  func.func @transform_5(%arg0: i32, %arg1: i32) -> (i32, i32) {
    %c0_i32 = arith.constant 0 : i32
    %c0_i32_0 = arith.constant 0 : i32
    return %c0_i32, %arg0 : i32, i32
  }
  func.func @transform_6(%arg0: i32, %arg1: i32) -> (i32, i32) {
    %c0_i32 = arith.constant 0 : i32
    %c0_i32_0 = arith.constant 0 : i32
    return %c0_i32, %arg0 : i32, i32
  }
}

</mosaic_0001>

<llo_original>
// kernel: tpu_custom_call.1
$region0: #{tpu_custom_call.1}
  #allocation0 [shape = 'u32[]', space=smem, size = 0x4, offset = 0x4, fixed_abs, tag = 'smem constant byte address 0x4 - core index']
  #allocation1 [shape = 'u32[144,128]{1,0:T(1,128)}', space=vmem, size = 0x12000, scoped, tag = 'internal scratch']
  #allocation2 [shape = 'f32[8,128]{1,0:T(8,128)}', space=vmem, size = 0x1000, scoped, tag = 'scratch operand']
  %s0 = inlined_call_operand.hbm [shape: f32[8,128], index: 0, kind: input, shape index: {}]
  %s1 = inlined_call_operand.hbm [shape: f32[128,128], index: 1, kind: input, shape index: {}]
  %s2 = inlined_call_operand.hbm [shape: f32[128,128], index: 2, kind: input, shape index: {}]
  %s3 = inlined_call_operand.vmem [shape: f32[1,128], index: 3, kind: input, shape index: {}]
  %s4 = inlined_call_operand.vmem [shape: f32[1,128], index: 4, kind: input, shape index: {}]
  %s5 = inlined_call_operand.vmem [shape: f32[1,128], index: 5, kind: input, shape index: {}]
  %s6 = inlined_call_operand.hbm [shape: f32[8,128], index: 6, kind: output, shape index: {}]
  %s7 = sld [smem:[#allocation0]]
  $region54: #{tpu_custom_call.1} parent=0
    _
  %s9 = ssub.s32 1, %s7
  %s10 = scalar_select 0, %s9, %s7
  $region1: #{tpu_custom_call.1} parent=0
    #allocation3 [shape = 'u8[4096]{0}', space=vmem, size = 0x1000, scoped, tag = 'input window, operand 0, single buffered']
    #allocation4 [shape = 's32[1]{0}', space=sflag, size = 0x4, scoped, tag = 'scoped memory for tpu_custom_call.1']
    #allocation5 [shape = 's32[1]{0}', space=sflag, size = 0x4, scoped, tag = 'scoped memory for tpu_custom_call.1']
    #allocation6 [shape = 'u8[65536]{0}', space=vmem, size = 0x10000, scoped, tag = 'input window, operand 1, single buffered']
    #allocation7 [shape = 's32[1]{0}', space=sflag, size = 0x4, scoped, tag = 'scoped memory for tpu_custom_call.1']
    #allocation8 [shape = 'u8[65536]{0}', space=vmem, size = 0x10000, scoped, tag = 'input window, operand 2, single buffered']
    #allocation9 [shape = 'u8[4096]{0}', space=vmem, size = 0x1000, scoped, tag = 'output window, operand 0, single buffered']
    %11 = vsyncpa [#allocation4], 0
    %12 = vsyncpa [#allocation7], 0
    %13 = vsyncpa [#allocation5], 0
    // Predicated region
    $region2: #{tpu_custom_call.1} parent=1 // pred_check
      _
    $region3: #{tpu_custom_call.1} parent=1 // pred_check_branch
      %15 = sbr.rel (0) target = $region5
    $region4: #{tpu_custom_call.1} parent=1 // pred_region
      %s17 = ssub.s32 128, 128
      %18 = vsyncadd [#allocation4], %s17
      %s20 = sshll.u32 [#allocation3], 4
      %s21 = int_to_ptr.vmem [resolvable:$true] %s20
      %23 = dma.hbm_to_vmem [thread:$0]  %s0, 128, %s21, [#allocation4]
    $region5: #{tpu_custom_call.1} parent=1 // pred_fallthru
      _
    // Predicated region
    $region6: #{tpu_custom_call.1} parent=1 // pred_check
      _
    $region7: #{tpu_custom_call.1} parent=1 // pred_check_branch
      %25 = sbr.rel (0) target = $region9
    $region8: #{tpu_custom_call.1} parent=1 // pred_region
      %s27 = ssub.s32 2048, 2048
      %28 = vsyncadd [#allocation7], %s27
      %s29 = sshll.u32 [#allocation6], 4
      %s30 = int_to_ptr.vmem [resolvable:$true] %s29
      %35 = dma.hbm_to_vmem [thread:$0]  %s1, 2048, %s30, [#allocation7], 128, 128, 8
    $region9: #{tpu_custom_call.1} parent=1 // pred_fallthru
      _
    // Predicated region
    $region10: #{tpu_custom_call.1} parent=1 // pred_check
      _
    $region11: #{tpu_custom_call.1} parent=1 // pred_check_branch
      %37 = sbr.rel (0) target = $region13
    $region12: #{tpu_custom_call.1} parent=1 // pred_region
      %s39 = ssub.s32 2048, 2048
      %40 = vsyncadd [#allocation7], %s39
      %s41 = sshll.u32 [#allocation8], 4
      %s42 = int_to_ptr.vmem [resolvable:$true] %s41
      %47 = dma.hbm_to_vmem [thread:$0]  %s2, 2048, %s42, [#allocation7], 128, 128, 8
    $region13: #{tpu_custom_call.1} parent=1 // pred_fallthru
      _
    // Predicated region
    $region14: #{tpu_custom_call.1} parent=1 // pred_check
      _
    $region15: #{tpu_custom_call.1} parent=1 // pred_check_branch
      %49 = sbr.rel (0) target = $region17
    $region16: #{tpu_custom_call.1} parent=1 // pred_region
      _
    $region17: #{tpu_custom_call.1} parent=1 // pred_fallthru
      _
    // Predicated region
    $region18: #{tpu_custom_call.1} parent=1 // pred_check
      _
    $region19: #{tpu_custom_call.1} parent=1 // pred_check_branch
      %51 = sbr.rel (0) target = $region21
    $region20: #{tpu_custom_call.1} parent=1 // pred_region
      _
    $region21: #{tpu_custom_call.1} parent=1 // pred_fallthru
      _
    // Predicated region
    $region22: #{tpu_custom_call.1} parent=1 // pred_check
      _
    $region23: #{tpu_custom_call.1} parent=1 // pred_check_branch
      %53 = sbr.rel (0) target = $region25
    $region24: #{tpu_custom_call.1} parent=1 // pred_region
      _
    $region25: #{tpu_custom_call.1} parent=1 // pred_fallthru
      _
    // Predicated region
    $region26: #{tpu_custom_call.1} parent=1 // pred_check
      _
    $region27: #{tpu_custom_call.1} parent=1 // pred_check_branch
      %55 = sbr.rel (0) target = $region29
    $region28: #{tpu_custom_call.1} parent=1 // pred_region
      %56 = dma.done [#allocation4], 128
    $region29: #{tpu_custom_call.1} parent=1 // pred_fallthru
      _
    // Predicated region
    $region30: #{tpu_custom_call.1} parent=1 // pred_check
      _
    $region31: #{tpu_custom_call.1} parent=1 // pred_check_branch
      %58 = sbr.rel (0) target = $region33
    $region32: #{tpu_custom_call.1} parent=1 // pred_region
      %59 = dma.done [#allocation7], 2048
    $region33: #{tpu_custom_call.1} parent=1 // pred_fallthru
      _
    // Predicated region
    $region34: #{tpu_custom_call.1} parent=1 // pred_check
      _
    $region35: #{tpu_custom_call.1} parent=1 // pred_check_branch
      %61 = sbr.rel (0) target = $region37
    $region36: #{tpu_custom_call.1} parent=1 // pred_region
      %62 = dma.done [#allocation7], 2048
    $region37: #{tpu_custom_call.1} parent=1 // pred_fallthru
      _
    %p63 = scmp.eq.s32.totalorder 0, 0
    // Predicated region
    $region38: #{tpu_custom_call.1} parent=1 // pred_check
      %p64 = pneg %p63
    $region39: #{tpu_custom_call.1} parent=1 // pred_check_branch
      %66 = sbr.rel (%p64) target = $region41
    $region40: #{tpu_custom_call.1} parent=1 // pred_region
      %67 = vst [vmem:[#allocation2] sm:$0xff] 0.0
    $region41: #{tpu_custom_call.1} parent=1 // pred_fallthru
      _
    %v68 = vld [vmem:[#allocation3] sm:$0xff]
    %v69 = vld [vmem:[%s4] sm:$0x1]
    %v71 = vlaneseq
    %v72 = vshrl.u32 %v71, 7
    %v73 = vsub.s32 0, %v72
    %v74 = vrot.slane %v69, %v73
    %v76 = vmul.f32 %v68, %v74
    %v77 = vld [vmem:[#allocation6] sm:$0xff]
    %v78 = vld [vmem:[#allocation6 + $0x8] sm:$0xff]
    %v79 = vld [vmem:[#allocation6 + $0x10] sm:$0xff]
    %v80 = vld [vmem:[#allocation6 + $0x18] sm:$0xff]
    %v81 = vld [vmem:[#allocation6 + $0x20] sm:$0xff]
    %v82 = vld [vmem:[#allocation6 + $0x28] sm:$0xff]
    %v83 = vld [vmem:[#allocation6 + $0x30] sm:$0xff]
    %v84 = vld [vmem:[#allocation6 + $0x38] sm:$0xff]
    %v85 = vld [vmem:[#allocation6 + $0x40] sm:$0xff]
    %v86 = vld [vmem:[#allocation6 + $0x48] sm:$0xff]
    %v87 = vld [vmem:[#allocation6 + $0x50] sm:$0xff]
    %v88 = vld [vmem:[#allocation6 + $0x58] sm:$0xff]
    %v89 = vld [vmem:[#allocation6 + $0x60] sm:$0xff]
    %v90 = vld [vmem:[#allocation6 + $0x68] sm:$0xff]
    %v91 = vld [vmem:[#allocation6 + $0x70] sm:$0xff]
    %v92 = vld [vmem:[#allocation6 + $0x78] sm:$0xff]
    %v93 = vld [vmem:[#allocation8] sm:$0xff]
    %v94 = vld [vmem:[#allocation8 + $0x8] sm:$0xff]
    %v95 = vld [vmem:[#allocation8 + $0x10] sm:$0xff]
    %v96 = vld [vmem:[#allocation8 + $0x18] sm:$0xff]
    %v97 = vld [vmem:[#allocation8 + $0x20] sm:$0xff]
    %v98 = vld [vmem:[#allocation8 + $0x28] sm:$0xff]
    %v99 = vld [vmem:[#allocation8 + $0x30] sm:$0xff]
    %v100 = vld [vmem:[#allocation8 + $0x38] sm:$0xff]
    %v101 = vld [vmem:[#allocation8 + $0x40] sm:$0xff]
    %v102 = vld [vmem:[#allocation8 + $0x48] sm:$0xff]
    %v103 = vld [vmem:[#allocation8 + $0x50] sm:$0xff]
    %v104 = vld [vmem:[#allocation8 + $0x58] sm:$0xff]
    %v105 = vld [vmem:[#allocation8 + $0x60] sm:$0xff]
    %v106 = vld [vmem:[#allocation8 + $0x68] sm:$0xff]
    %v107 = vld [vmem:[#allocation8 + $0x70] sm:$0xff]
    %v108 = vld [vmem:[#allocation8 + $0x78] sm:$0xff]
    %109 = vmatprep.subr.mxu0 0.0
    %110 = vmatpush1.xpose.msra.mxu0 %v93
    %111 = vmatprep.subr.mxu0 0.0
    %112 = vmatpush1.xpose.msra.mxu0 %v94
    %113 = vmatprep.subr.mxu0 0.0
    %114 = vmatpush1.xpose.msra.mxu0 %v95
    %115 = vmatprep.subr.mxu0 0.0
    %116 = vmatpush1.xpose.msra.mxu0 %v96
    %117 = vmatprep.subr.mxu0 0.0
    %118 = vmatpush1.xpose.msra.mxu0 %v97
    %119 = vmatprep.subr.mxu0 0.0
    %120 = vmatpush1.xpose.msra.mxu0 %v98
    %121 = vmatprep.subr.mxu0 0.0
    %122 = vmatpush1.xpose.msra.mxu0 %v99
    %123 = vmatprep.subr.mxu0 0.0
    %124 = vmatpush1.xpose.msra.mxu0 %v100
    %125 = vmatprep.subr.mxu0 0.0
    %126 = vmatpush1.xpose.msra.mxu0 %v101
    %127 = vmatprep.subr.mxu0 0.0
    %128 = vmatpush1.xpose.msra.mxu0 %v102
    %129 = vmatprep.subr.mxu0 0.0
    %130 = vmatpush1.xpose.msra.mxu0 %v103
    %131 = vmatprep.subr.mxu0 0.0
    %132 = vmatpush1.xpose.msra.mxu0 %v104
    %133 = vmatprep.subr.mxu0 0.0
    %134 = vmatpush1.xpose.msra.mxu0 %v105
    %135 = vmatprep.subr.mxu0 0.0
    %136 = vmatpush1.xpose.msra.mxu0 %v106
    %137 = vmatprep.subr.mxu0 0.0
    %138 = vmatpush1.xpose.msra.mxu0 %v107
    %139 = vmatprep.subr.mxu0 0.0
    %140 = vmatpush1.xpose.msra.mxu0 %v108
    %141 = vmatprep.subr.mxu0 0.0
    %142 = vmatpush1.xpose.msra.mxu0 0.0
    %143 = vmatprep.subr.mxu0 0.0
    %144 = vmatpush1.xpose.msra.mxu0 0.0
    %145 = vmatprep.subr.mxu0 0.0
    %146 = vmatpush1.xpose.msra.mxu0 0.0
    %147 = vmatprep.subr.mxu0 0.0
    %148 = vmatpush1.xpose.msra.mxu0 0.0
    %149 = vmatprep.subr.mxu0 0.0
    %150 = vmatpush1.xpose.msra.mxu0 0.0
    %151 = vmatprep.subr.mxu0 0.0
    %152 = vmatpush1.xpose.msra.mxu0 0.0
    %153 = vmatprep.subr.mxu0 0.0
    %154 = vmatpush1.xpose.msra.mxu0 0.0
    %155 = vmatprep.subr.mxu0 0.0
    %156 = vmatpush1.xpose.msra.mxu0 0.0
    %157 = vmatprep.subr.mxu0 0.0
    %158 = vmatpush1.xpose.msra.mxu0 0.0
    %159 = vmatprep.subr.mxu0 0.0
    %160 = vmatpush1.xpose.msra.mxu0 0.0
    %161 = vmatprep.subr.mxu0 0.0
    %162 = vmatpush1.xpose.msra.mxu0 0.0
    %163 = vmatprep.subr.mxu0 0.0
    %164 = vmatpush1.xpose.msra.mxu0 0.0
    %165 = vmatprep.subr.mxu0 0.0
    %166 = vmatpush1.xpose.msra.mxu0 0.0
    %167 = vmatprep.subr.mxu0 0.0
    %168 = vmatpush1.xpose.msra.mxu0 0.0
    %169 = vmatprep.subr.mxu0 0.0
    %170 = vmatpush1.xpose.msra.mxu0 0.0
    %171 = vmatprep.subr.mxu0 0.0
    %172 = vmatpush1.xpose.msra.mxu0 0.0
    %173 = vmatprep.mubr.f32.mxu0 0.0
    %174 = vmatmul.mubr.f32.gmra.mrb[0].mxu0 %v76
    %v175 = vpop.f32.mrb[0].mxu0
    %v176 = vadd.f32 0.0, %v175
    %v177 = vpop.f32.mrb[0].mxu0
    %178 = vdwg.mxu0
    %v179 = vld [vmem:[#allocation2] sm:$0xff]
    %v180 = vld [vmem:[%s5] sm:$0x1]
    %v182 = vlaneseq
    %v183 = vshrl.u32 %v182, 7
    %v184 = vsub.s32 0, %v183
    %v185 = vrot.slane %v180, %v184
    %v187 = vmul.f32 %v185, %v176
    %188 = vmatprep.subr.mxu0 0.0
    %189 = vmatpush1.xpose.msra.mxu0 %v77
    %190 = vmatprep.subr.mxu0 0.0
    %191 = vmatpush1.xpose.msra.mxu0 %v78
    %192 = vmatprep.subr.mxu0 0.0
    %193 = vmatpush1.xpose.msra.mxu0 %v79
    %194 = vmatprep.subr.mxu0 0.0
    %195 = vmatpush1.xpose.msra.mxu0 %v80
    %196 = vmatprep.subr.mxu0 0.0
    %197 = vmatpush1.xpose.msra.mxu0 %v81
    %198 = vmatprep.subr.mxu0 0.0
    %199 = vmatpush1.xpose.msra.mxu0 %v82
    %200 = vmatprep.subr.mxu0 0.0
    %201 = vmatpush1.xpose.msra.mxu0 %v83
    %202 = vmatprep.subr.mxu0 0.0
    %203 = vmatpush1.xpose.msra.mxu0 %v84
    %204 = vmatprep.subr.mxu0 0.0
    %205 = vmatpush1.xpose.msra.mxu0 %v85
    %206 = vmatprep.subr.mxu0 0.0
    %207 = vmatpush1.xpose.msra.mxu0 %v86
    %208 = vmatprep.subr.mxu0 0.0
    %209 = vmatpush1.xpose.msra.mxu0 %v87
    %210 = vmatprep.subr.mxu0 0.0
    %211 = vmatpush1.xpose.msra.mxu0 %v88
    %212 = vmatprep.subr.mxu0 0.0
    %213 = vmatpush1.xpose.msra.mxu0 %v89
    %214 = vmatprep.subr.mxu0 0.0
    %215 = vmatpush1.xpose.msra.mxu0 %v90
    %216 = vmatprep.subr.mxu0 0.0
    %217 = vmatpush1.xpose.msra.mxu0 %v91
    %218 = vmatprep.subr.mxu0 0.0
    %219 = vmatpush1.xpose.msra.mxu0 %v92
    %220 = vmatprep.subr.mxu0 0.0
    %221 = vmatpush1.xpose.msra.mxu0 0.0
    %222 = vmatprep.subr.mxu0 0.0
    %223 = vmatpush1.xpose.msra.mxu0 0.0
    %224 = vmatprep.subr.mxu0 0.0
    %225 = vmatpush1.xpose.msra.mxu0 0.0
    %226 = vmatprep.subr.mxu0 0.0
    %227 = vmatpush1.xpose.msra.mxu0 0.0
    %228 = vmatprep.subr.mxu0 0.0
    %229 = vmatpush1.xpose.msra.mxu0 0.0
    %230 = vmatprep.subr.mxu0 0.0
    %231 = vmatpush1.xpose.msra.mxu0 0.0
    %232 = vmatprep.subr.mxu0 0.0
    %233 = vmatpush1.xpose.msra.mxu0 0.0
    %234 = vmatprep.subr.mxu0 0.0
    %235 = vmatpush1.xpose.msra.mxu0 0.0
    %236 = vmatprep.subr.mxu0 0.0
    %237 = vmatpush1.xpose.msra.mxu0 0.0
    %238 = vmatprep.subr.mxu0 0.0
    %239 = vmatpush1.xpose.msra.mxu0 0.0
    %240 = vmatprep.subr.mxu0 0.0
    %241 = vmatpush1.xpose.msra.mxu0 0.0
    %242 = vmatprep.subr.mxu0 0.0
    %243 = vmatpush1.xpose.msra.mxu0 0.0
    %244 = vmatprep.subr.mxu0 0.0
    %245 = vmatpush1.xpose.msra.mxu0 0.0
    %246 = vmatprep.subr.mxu0 0.0
    %247 = vmatpush1.xpose.msra.mxu0 0.0
    %248 = vmatprep.subr.mxu0 0.0
    %249 = vmatpush1.xpose.msra.mxu0 0.0
    %250 = vmatprep.subr.mxu0 0.0
    %251 = vmatpush1.xpose.msra.mxu0 0.0
    %252 = vmatprep.mubr.f32.mxu0 0.0
    %253 = vmatmul.mubr.f32.gmra.mrb[0].mxu0 %v68
    %v254 = vpop.f32.mrb[0].mxu0
    %v255 = vadd.f32 %v187, %v254
    %v256 = vpop.f32.mrb[0].mxu0
    %257 = vdwg.mxu0
    %v258 = vadd.f32 %v179, %v255
    %259 = vst [vmem:[#allocation2] sm:$0xff] %v258
    // Predicated region
    $region42: #{tpu_custom_call.1} parent=1 // pred_check
      %p260 = pneg %p63
    $region43: #{tpu_custom_call.1} parent=1 // pred_check_branch
      %262 = sbr.rel (%p260) target = $region45
    $region44: #{tpu_custom_call.1} parent=1 // pred_region
      %v263 = vld [vmem:[#allocation2] sm:$0xff]
      %v264 = vld [vmem:[%s3] sm:$0x1]
      %v266 = vlaneseq
      %v267 = vshrl.u32 %v266, 7
      %v268 = vsub.s32 0, %v267
      %v269 = vrot.slane %v264, %v268
      %v271 = vadd.f32 %v263, %v269
      %272 = vst [vmem:[#allocation9] sm:$0xff] %v271
    $region45: #{tpu_custom_call.1} parent=1 // pred_fallthru
      _
    // Predicated region
    $region46: #{tpu_custom_call.1} parent=1 // pred_check
      _
    $region47: #{tpu_custom_call.1} parent=1 // pred_check_branch
      %274 = sbr.rel (0) target = $region49
    $region48: #{tpu_custom_call.1} parent=1 // pred_region
      %s276 = ssub.s32 128, 128
      %277 = vsyncadd [#allocation5], %s276
      %s279 = sshll.u32 [#allocation9], 4
      %s280 = int_to_ptr.vmem [resolvable:$true] %s279
      %282 = dma.vmem_to_hbm [thread:$0]  %s280, 128, %s6, [#allocation5]
    $region49: #{tpu_custom_call.1} parent=1 // pred_fallthru
      _
    // Predicated region
    $region50: #{tpu_custom_call.1} parent=1 // pred_check
      _
    $region51: #{tpu_custom_call.1} parent=1 // pred_check_branch
      %284 = sbr.rel (0) target = $region53
    $region52: #{tpu_custom_call.1} parent=1 // pred_region
      %285 = dma.done [#allocation5], 128
    $region53: #{tpu_custom_call.1} parent=1 // pred_fallthru
      _
    %286 = vsyncpa [#allocation4], 1
    %287 = vsyncpa [#allocation7], 1
    %288 = vsyncpa [#allocation5], 1

</llo_original>
